<compile_context>
chip_gen: v5e
topology: v5e:2x2
jax: 0.10.0
libtpu: 0.0.40
codegen_flags: <defaults>
</compile_context>

<pallas_src>
import functools

import jax
import jax.numpy as jnp
from jax.experimental import pallas as pl
from jax.experimental.pallas import tpu as pltpu  # noqa: F401  (TPU backend)


def _rnn_gen_kernel(z_ref, h0_ref, wz_ref, wh_ref, b_ref,
                    out_ref, h_final_ref,
                    *, num_steps, hidden_size, output_size):
    """Fully unrolled T-step RNN-generator recurrence.

    All refs are whole-array VMEM residents (no grid).  Output layout is
    lane-dense: out_ref is (B, T*O), step t owns columns [t*O, (t+1)*O).
    """
    B = z_ref.shape[0]
    HO = b_ref.shape[1]                                   # H + O

    # Hoisted bias broadcast: one broadcast_in_dim total, not one per step.
    bias = jnp.broadcast_to(b_ref[...], (B, HO))          # (B, H+O)

    # z is consumed only at step 0 (forward_G feeds zeros afterwards), so the
    # z @ Wz MXU push happens exactly once, fused with the bias add.
    z_term = jnp.dot(z_ref[...], wz_ref[...],
                     preferred_element_type=jnp.float32) + bias   # (B, H+O)

    h = h0_ref[...].astype(jnp.float32)                   # (B, H) carried in vregs

    # Static Python unroll: no grid-step overhead, weights/hidden stay
    # resident, independent MXU pushes of step t+1 can overlap step t's
    # log-softmax EUP/XLU chain.
    for t in range(num_steps):
        add_term = z_term if t == 0 else bias
        # Fused projection: [hidden_new | logits] = h @ Wh (+ z @ Wz) + b
        fused = jnp.dot(h, wh_ref[...],
                        preferred_element_type=jnp.float32) + add_term  # (B, H+O)

        # Static lane slices; H+O = 48 stays inside a single (8,128) tile.
        h = fused[:, :hidden_size]                         # (B, H)
        logits = fused[:, hidden_size:]                    # (B, O)

        # Numerically stable log-softmax over the feature axis (dim=1).
        m = jnp.max(logits, axis=1, keepdims=True)
        shifted = logits - m
        lse = jnp.log(jnp.sum(jnp.exp(shifted), axis=1, keepdims=True))
        out_ref[:, t * output_size:(t + 1) * output_size] = (
            shifted - lse).astype(out_ref.dtype)

    # Single final hidden-state store.
    h_final_ref[...] = h.astype(h_final_ref.dtype)


def rnn_generator_steps(z, h0, w_hidden, b_hidden, w_output, b_output, num_steps):
    """Run `num_steps` generator steps in one gridless pallas_call.

    Step 0 consumes `z`; steps 1..num_steps-1 consume zeros (as in forward_G).
    Returns (out (B, num_steps*O) lane-dense log-softmax slab, h_final (B, H)).
    """
    B, L = z.shape
    H = h0.shape[1]
    O = w_output.shape[1]

    # One-time host-side param prep: fuse hidden/output projections
    # column-wise, then split rows into latent / hidden parts.
    w_fused = jnp.concatenate([w_hidden, w_output], axis=1)      # (L+H, H+O)
    wz = w_fused[:L]                                             # (L,   H+O)
    wh = w_fused[L:]                                             # (H,   H+O)
    b_fused = jnp.concatenate([b_hidden, b_output], axis=1)      # (1,   H+O)

    kernel = functools.partial(_rnn_gen_kernel, num_steps=num_steps,
                               hidden_size=H, output_size=O)

    out, h_final = pl.pallas_call(
        kernel,
        out_shape=(
            jax.ShapeDtypeStruct((B, num_steps * O), jnp.float32),  # lane-dense outputs
            jax.ShapeDtypeStruct((B, H), jnp.float32),              # final hidden
        ),
    )(z, h0, wz, wh, b_fused)
    return out, h_final


def basic_rnn_generator_forward(z, hidden, w_hidden, b_hidden, w_output, b_output):
    """Equivalent of basic_rnn_generator.forward(input, hidden)."""
    out, h_new = rnn_generator_steps(
        z, hidden, w_hidden, b_hidden, w_output, b_output, num_steps=1)
    return out, h_new


def basic_rnn_generator_forward_G(z, num_pieces, w_hidden, b_hidden, w_output, b_output):
    """Equivalent of basic_rnn_generator.forward_G: hidden starts at zero,
    step 0 consumes z, remaining steps consume zeros; pieces are concatenated
    along the feature axis into the generated batch (B, num_pieces * O)."""
    B, _ = z.shape
    H = w_hidden.shape[1]
    h0 = jnp.zeros((B, H), jnp.float32)
    out, _ = rnn_generator_steps(
        z, h0, w_hidden, b_hidden, w_output, b_output, num_steps=num_pieces)
    return out  # already (B, num_pieces * O), lane-dense — no transpose needed


# ------------------------- pure-JAX references -------------------------

def reference_forward(z, hidden, w_hidden, b_hidden, w_output, b_output):
    combined = jnp.concatenate([z, hidden], axis=1)
    h_new = combined @ w_hidden + b_hidden
    logits = combined @ w_output + b_output
    return jax.nn.log_softmax(logits, axis=1), h_new


def reference_forward_G(z, num_pieces, w_hidden, b_hidden, w_output, b_output):
    B, L = z.shape
    H = w_hidden.shape[1]
    hidden = jnp.zeros((B, H), jnp.float32)
    pieces = []
    inp = z
    for _ in range(num_pieces):
        out, hidden = reference_forward(
            inp, hidden, w_hidden, b_hidden, w_output, b_output)
        pieces.append(out)
        inp = jnp.zeros((B, L), jnp.float32)
    return jnp.concatenate(pieces, axis=1)


if __name__ == "__main__":
    # Small config implied by the module:
    #   LATENT_DIMENSION=32, HIDDEN_SIZE=32, SONG_PIECE_SIZE (output_size)=16,
    #   SONG_LENGTH = 128  ->  8 pieces.
    LATENT_DIMENSION = 32
    HIDDEN_SIZE = 32
    OUTPUT_SIZE = 16
    NUM_PIECES = 8
    BATCH = 8

    key = jax.random.PRNGKey(0)
    k_z, k_h, k_wh, k_bh, k_wo, k_bo = jax.random.split(key, 6)

    z = jax.random.normal(k_z, (BATCH, LATENT_DIMENSION), dtype=jnp.float32)
    hidden = jax.random.normal(k_h, (BATCH, HIDDEN_SIZE), dtype=jnp.float32)

    in_dim = LATENT_DIMENSION + HIDDEN_SIZE
    bound = 1.0 / jnp.sqrt(jnp.float32(in_dim))
    w_hidden = jax.random.uniform(k_wh, (in_dim, HIDDEN_SIZE),
                                  minval=-bound, maxval=bound, dtype=jnp.float32)
    b_hidden = jax.random.uniform(k_bh, (1, HIDDEN_SIZE),
                                  minval=-bound, maxval=bound, dtype=jnp.float32)
    w_output = jax.random.uniform(k_wo, (in_dim, OUTPUT_SIZE),
                                  minval=-bound, maxval=bound, dtype=jnp.float32)
    b_output = jax.random.uniform(k_bo, (1, OUTPUT_SIZE),
                                  minval=-bound, maxval=bound, dtype=jnp.float32)

    # ---- forward(): single step, arbitrary hidden ----
    out, h_new = basic_rnn_generator_forward(
        z, hidden, w_hidden, b_hidden, w_output, b_output)
    jax.block_until_ready((out, h_new))
    out_ref, h_ref = reference_forward(
        z, hidden, w_hidden, b_hidden, w_output, b_output)
    assert jnp.allclose(out, out_ref, atol=1e-5, rtol=1e-5), "forward output mismatch"
    assert jnp.allclose(h_new, h_ref, atol=1e-5, rtol=1e-5), "forward hidden mismatch"

    # ---- forward_G(): fully in-kernel unrolled sequence, lane-dense output ----
    gen = basic_rnn_generator_forward_G(
        z, NUM_PIECES, w_hidden, b_hidden, w_output, b_output)
    jax.block_until_ready(gen)
    gen_ref = reference_forward_G(
        z, NUM_PIECES, w_hidden, b_hidden, w_output, b_output)
    assert gen.shape == (BATCH, NUM_PIECES * OUTPUT_SIZE)
    assert jnp.allclose(gen, gen_ref, atol=1e-5, rtol=1e-5), "forward_G mismatch"

    # TODO(synk): nn.BCELoss (self.loss) is a training criterion outside the
    # forward path and is not implemented in Pallas.

    print("KERNEL_OK")
</pallas_src>

<mosaic_0001>
module attributes {stable_mosaic.version = 11 : i64} {
  func.func @_rnn_gen_kernel(%arg0: memref<8x32xf32, #tpu.memory_space<vmem>>, %arg1: memref<8x32xf32, #tpu.memory_space<vmem>>, %arg2: memref<32x48xf32, #tpu.memory_space<vmem>>, %arg3: memref<32x48xf32, #tpu.memory_space<vmem>>, %arg4: memref<1x48xf32, #tpu.memory_space<vmem>>, %arg5: memref<8x16xf32, #tpu.memory_space<vmem>>, %arg6: memref<8x32xf32, #tpu.memory_space<vmem>>) attributes {dimension_semantics = [], scalar_prefetch = 0 : i64, scratch_operands = 0 : i64, tpu.core_type = #tpu.core_type<tc>} {
    %c0 = arith.constant 0 : index
    %c0_0 = arith.constant 0 : index
    %0 = vector.load %arg4[%c0, %c0_0] : memref<1x48xf32, #tpu.memory_space<vmem>>, vector<1x48xf32>
    %1 = vector.shape_cast %0 : vector<1x48xf32> to vector<1x48xf32>
    %2 = vector.broadcast %1 : vector<1x48xf32> to vector<8x48xf32>
    %c0_1 = arith.constant 0 : index
    %c0_2 = arith.constant 0 : index
    %3 = vector.load %arg0[%c0_1, %c0_2] : memref<8x32xf32, #tpu.memory_space<vmem>>, vector<8x32xf32>
    %c0_3 = arith.constant 0 : index
    %c0_4 = arith.constant 0 : index
    %4 = vector.load %arg2[%c0_3, %c0_4] : memref<32x48xf32, #tpu.memory_space<vmem>>, vector<32x48xf32>
    %cst = arith.constant dense<0.000000e+00> : vector<8x48xf32>
    %5 = tpu.matmul %3, %4, %cst {dimension_numbers = #tpu.dot_dimension_numbers<[1], [0], [0], [1], [0, 0, 1, 1], [], []>} : vector<8x32xf32>, vector<32x48xf32>, vector<8x48xf32> -> vector<8x48xf32>
    %6 = arith.addf %5, %2 : vector<8x48xf32>
    %c0_5 = arith.constant 0 : index
    %c0_6 = arith.constant 0 : index
    %7 = vector.load %arg1[%c0_5, %c0_6] : memref<8x32xf32, #tpu.memory_space<vmem>>, vector<8x32xf32>
    %c0_7 = arith.constant 0 : index
    %c0_8 = arith.constant 0 : index
    %8 = vector.load %arg3[%c0_7, %c0_8] : memref<32x48xf32, #tpu.memory_space<vmem>>, vector<32x48xf32>
    %cst_9 = arith.constant dense<0.000000e+00> : vector<8x48xf32>
    %9 = tpu.matmul %7, %8, %cst_9 {dimension_numbers = #tpu.dot_dimension_numbers<[1], [0], [0], [1], [0, 0, 1, 1], [], []>} : vector<8x32xf32>, vector<32x48xf32>, vector<8x48xf32> -> vector<8x48xf32>
    %10 = arith.addf %9, %6 : vector<8x48xf32>
    %11 = vector.extract_strided_slice %10 {offsets = [0, 0], sizes = [8, 32], strides = [1, 1]} : vector<8x48xf32> to vector<8x32xf32>
    %12 = vector.extract_strided_slice %10 {offsets = [0, 32], sizes = [8, 16], strides = [1, 1]} : vector<8x48xf32> to vector<8x16xf32>
    %cst_10 = arith.constant dense<0xFF800000> : vector<8xf32>
    %13 = vector.multi_reduction <maximumf>, %12, %cst_10 [1] : vector<8x16xf32> to vector<8xf32>
    %14 = vector.shape_cast %13 : vector<8xf32> to vector<8x1xf32>
    %15 = vector.broadcast %14 : vector<8x1xf32> to vector<8x16xf32>
    %16 = arith.subf %12, %15 : vector<8x16xf32>
    %17 = math.exp %16 : vector<8x16xf32>
    %cst_11 = arith.constant dense<0.000000e+00> : vector<8xf32>
    %18 = vector.multi_reduction <add>, %17, %cst_11 [1] : vector<8x16xf32> to vector<8xf32>
    %19 = vector.shape_cast %18 : vector<8xf32> to vector<8x1xf32>
    %20 = math.log %19 : vector<8x1xf32>
    %21 = vector.broadcast %20 : vector<8x1xf32> to vector<8x16xf32>
    %22 = arith.subf %16, %21 : vector<8x16xf32>
    %c0_12 = arith.constant 0 : index
    %c0_13 = arith.constant 0 : index
    %23 = vector.load %arg5[%c0_12, %c0_13] : memref<8x16xf32, #tpu.memory_space<vmem>>, vector<8x16xf32>
    tpu.vector_store %arg5[%c0_12, %c0_13], %22 {strides = array<i32>} : memref<8x16xf32, #tpu.memory_space<vmem>>, vector<8x16xf32>,
    %c0_14 = arith.constant 0 : index
    %c0_15 = arith.constant 0 : index
    %24 = vector.load %arg6[%c0_14, %c0_15] : memref<8x32xf32, #tpu.memory_space<vmem>>, vector<8x32xf32>
    tpu.vector_store %arg6[%c0_14, %c0_15], %11 {strides = array<i32>} : memref<8x32xf32, #tpu.memory_space<vmem>>, vector<8x32xf32>,
    return
  }
}

</mosaic_0001>

<llo_original>
// kernel: tpu_custom_call.1
$region0: #{tpu_custom_call.1}
  #allocation0 [shape = 'u32[]', space=smem, size = 0x4, offset = 0x4, fixed_abs, tag = 'smem constant byte address 0x4 - core index']
  #allocation1 [shape = 'u32[72,128]{1,0:T(1,128)}', space=vmem, size = 0x9000, scoped, tag = 'internal scratch']
  %s0 = inlined_call_operand.hbm [shape: f32[8,32], index: 0, kind: input, shape index: {}]
  %s1 = inlined_call_operand.hbm [shape: f32[8,32], index: 1, kind: input, shape index: {}]
  %s2 = inlined_call_operand.hbm [shape: f32[32,48], index: 2, kind: input, shape index: {}]
  %s3 = inlined_call_operand.hbm [shape: f32[32,48], index: 3, kind: input, shape index: {}]
  %s4 = inlined_call_operand.vmem [shape: f32[1,48], index: 4, kind: input, shape index: {}]
  %s5 = inlined_call_operand.hbm [shape: f32[8,16], index: 5, kind: output, shape index: {0}]
  %s6 = inlined_call_operand.hbm [shape: f32[8,32], index: 6, kind: output, shape index: {1}]
  %7 = xla_tuple %s5, %s6
  %s8 = sld [smem:[#allocation0]]
  $region54: #{tpu_custom_call.1} parent=0
    _
  %s10 = ssub.s32 1, %s8
  %s11 = scalar_select 0, %s10, %s8
  $region1: #{tpu_custom_call.1} parent=0
    #allocation2 [shape = 'u8[4096]{0}', space=vmem, size = 0x1000, scoped, tag = 'input window, operand 0, single buffered']
    #allocation3 [shape = 's32[1]{0}', space=sflag, size = 0x4, scoped, tag = 'scoped memory for tpu_custom_call.1']
    #allocation4 [shape = 's32[1]{0}', space=sflag, size = 0x4, scoped, tag = 'scoped memory for tpu_custom_call.1']
    #allocation5 [shape = 'u8[4096]{0}', space=vmem, size = 0x1000, scoped, tag = 'input window, operand 1, single buffered']
    #allocation6 [shape = 's32[1]{0}', space=sflag, size = 0x4, scoped, tag = 'scoped memory for tpu_custom_call.1']
    #allocation7 [shape = 'u8[16384]{0}', space=vmem, size = 0x4000, scoped, tag = 'input window, operand 2, single buffered']
    #allocation8 [shape = 'u8[16384]{0}', space=vmem, size = 0x4000, scoped, tag = 'input window, operand 3, single buffered']
    #allocation9 [shape = 's32[1]{0}', space=sflag, size = 0x4, scoped, tag = 'scoped memory for tpu_custom_call.1']
    #allocation10 [shape = 'u8[4096]{0}', space=vmem, size = 0x1000, scoped, tag = 'output window, operand 0, single buffered']
    #allocation11 [shape = 'u8[4096]{0}', space=vmem, size = 0x1000, scoped, tag = 'output window, operand 1, single buffered']
    #allocation12 [shape = 's32[1]{0}', space=sflag, size = 0x4, scoped, tag = 'scoped memory for tpu_custom_call.1']
    %12 = vsyncpa [#allocation3], 0
    %13 = vsyncpa [#allocation6], 0
    %14 = vsyncpa [#allocation9], 0
    %15 = vsyncpa [#allocation4], 0
    %16 = vsyncpa [#allocation12], 0
    // Predicated region
    $region2: #{tpu_custom_call.1} parent=1 // pred_check
      _
    $region3: #{tpu_custom_call.1} parent=1 // pred_check_branch
      %18 = sbr.rel (0) target = $region5
    $region4: #{tpu_custom_call.1} parent=1 // pred_region
      %20 = vsyncadd [#allocation3], 0
      %s22 = sshll.u32 %s0, 4
      %s23 = int_to_ptr.hbm [resolvable:$true] %s22
      %s24 = sshll.u32 [#allocation2], 4
      %s25 = int_to_ptr.vmem [resolvable:$true] %s24
      %27 = dma.hbm_to_vmem [thread:$0]  %s23, 128, %s25, [#allocation3]
    $region5: #{tpu_custom_call.1} parent=1 // pred_fallthru
      _
    // Predicated region
    $region6: #{tpu_custom_call.1} parent=1 // pred_check
      _
    $region7: #{tpu_custom_call.1} parent=1 // pred_check_branch
      %29 = sbr.rel (0) target = $region9
    $region8: #{tpu_custom_call.1} parent=1 // pred_region
      %31 = vsyncadd [#allocation6], 0
      %s33 = sshll.u32 %s1, 4
      %s34 = int_to_ptr.hbm [resolvable:$true] %s33
      %s35 = sshll.u32 [#allocation5], 4
      %s36 = int_to_ptr.vmem [resolvable:$true] %s35
      %38 = dma.hbm_to_vmem [thread:$0]  %s34, 128, %s36, [#allocation6]
    $region9: #{tpu_custom_call.1} parent=1 // pred_fallthru
      _
    // Predicated region
    $region10: #{tpu_custom_call.1} parent=1 // pred_check
      _
    $region11: #{tpu_custom_call.1} parent=1 // pred_check_branch
      %40 = sbr.rel (0) target = $region13
    $region12: #{tpu_custom_call.1} parent=1 // pred_region
      %42 = vsyncadd [#allocation6], 0
      %s43 = sshll.u32 %s2, 4
      %s44 = int_to_ptr.hbm [resolvable:$true] %s43
      %s45 = sshll.u32 [#allocation7], 4
      %s46 = int_to_ptr.vmem [resolvable:$true] %s45
      %51 = dma.hbm_to_vmem [thread:$0]  %s44, 512, %s46, [#allocation6], 128, 128, 8
    $region13: #{tpu_custom_call.1} parent=1 // pred_fallthru
      _
    // Predicated region
    $region14: #{tpu_custom_call.1} parent=1 // pred_check
      _
    $region15: #{tpu_custom_call.1} parent=1 // pred_check_branch
      %53 = sbr.rel (0) target = $region17
    $region16: #{tpu_custom_call.1} parent=1 // pred_region
      %55 = vsyncadd [#allocation9], 0
      %s56 = sshll.u32 %s3, 4
      %s57 = int_to_ptr.hbm [resolvable:$true] %s56
      %s58 = sshll.u32 [#allocation8], 4
      %s59 = int_to_ptr.vmem [resolvable:$true] %s58
      %64 = dma.hbm_to_vmem [thread:$0]  %s57, 512, %s59, [#allocation9], 128, 128, 8
    $region17: #{tpu_custom_call.1} parent=1 // pred_fallthru
      _
    // Predicated region
    $region18: #{tpu_custom_call.1} parent=1 // pred_check
      _
    $region19: #{tpu_custom_call.1} parent=1 // pred_check_branch
      %66 = sbr.rel (0) target = $region21
    $region20: #{tpu_custom_call.1} parent=1 // pred_region
      _
    $region21: #{tpu_custom_call.1} parent=1 // pred_fallthru
      _
    // Predicated region
    $region22: #{tpu_custom_call.1} parent=1 // pred_check
      _
    $region23: #{tpu_custom_call.1} parent=1 // pred_check_branch
      %68 = sbr.rel (0) target = $region25
    $region24: #{tpu_custom_call.1} parent=1 // pred_region
      %70 = dma.done [#allocation3], 128
    $region25: #{tpu_custom_call.1} parent=1 // pred_fallthru
      _
    // Predicated region
    $region26: #{tpu_custom_call.1} parent=1 // pred_check
      _
    $region27: #{tpu_custom_call.1} parent=1 // pred_check_branch
      %72 = sbr.rel (0) target = $region29
    $region28: #{tpu_custom_call.1} parent=1 // pred_region
      %74 = dma.done [#allocation6], 128
    $region29: #{tpu_custom_call.1} parent=1 // pred_fallthru
      _
    // Predicated region
    $region30: #{tpu_custom_call.1} parent=1 // pred_check
      _
    $region31: #{tpu_custom_call.1} parent=1 // pred_check_branch
      %76 = sbr.rel (0) target = $region33
    $region32: #{tpu_custom_call.1} parent=1 // pred_region
      %78 = dma.done [#allocation6], 512
    $region33: #{tpu_custom_call.1} parent=1 // pred_fallthru
      _
    // Predicated region
    $region34: #{tpu_custom_call.1} parent=1 // pred_check
      _
    $region35: #{tpu_custom_call.1} parent=1 // pred_check_branch
      %80 = sbr.rel (0) target = $region37
    $region36: #{tpu_custom_call.1} parent=1 // pred_region
      %82 = dma.done [#allocation9], 512
    $region37: #{tpu_custom_call.1} parent=1 // pred_fallthru
      _
    %v83 = vld [vmem:[%s4] sm:$0x1]
    %v85 = vperm.slane %v83, 0
    %v87 = vld [vmem:[#allocation2] sm:$0xff]
    %v88 = vld [vmem:[#allocation7] sm:$0xff]
    %v89 = vld [vmem:[#allocation7 + $0x8] sm:$0xff]
    %v90 = vld [vmem:[#allocation7 + $0x10] sm:$0xff]
    %v91 = vld [vmem:[#allocation7 + $0x18] sm:$0xff]
    %vm92 = vcmask 261120
    %v94 = vsel %vm92, %v87, 0
    %96 = vmatpush.msra.mxu0 0.0
    %97 = vmatpush.msra.mxu0 0.0
    %98 = vmatpush.msra.mxu0 0.0
    %99 = vmatpush.msra.mxu0 0.0
    %100 = vmatpush.msra.mxu0 0.0
    %101 = vmatpush.msra.mxu0 0.0
    %102 = vmatpush.msra.mxu0 0.0
    %103 = vmatpush.msra.mxu0 0.0
    %104 = vmatpush.msra.mxu0 0.0
    %105 = vmatpush.msra.mxu0 0.0
    %106 = vmatpush.msra.mxu0 0.0
    %107 = vmatpush.msra.mxu0 0.0
    %108 = vmatpush.msra.mxu0 %v91
    %109 = vmatpush.msra.mxu0 %v90
    %110 = vmatpush.msra.mxu0 %v89
    %111 = vmatpush.msra.mxu0 %v88
    %112 = vmatmul.f32.gmra.mxu0 %v94
    %v113 = vpop.f32.mrf.mxu0
    %v114 = vadd.f32 %v85, %v113
    %115 = vdwg.mxu0
    %v116 = vld [vmem:[#allocation5] sm:$0xff]
    %v117 = vld [vmem:[#allocation8] sm:$0xff]
    %v118 = vld [vmem:[#allocation8 + $0x8] sm:$0xff]
    %v119 = vld [vmem:[#allocation8 + $0x10] sm:$0xff]
    %v120 = vld [vmem:[#allocation8 + $0x18] sm:$0xff]
    %v122 = vsel %vm92, %v116, 0
    %124 = vmatpush.msra.mxu0 0.0
    %125 = vmatpush.msra.mxu0 0.0
    %126 = vmatpush.msra.mxu0 0.0
    %127 = vmatpush.msra.mxu0 0.0
    %128 = vmatpush.msra.mxu0 0.0
    %129 = vmatpush.msra.mxu0 0.0
    %130 = vmatpush.msra.mxu0 0.0
    %131 = vmatpush.msra.mxu0 0.0
    %132 = vmatpush.msra.mxu0 0.0
    %133 = vmatpush.msra.mxu0 0.0
    %134 = vmatpush.msra.mxu0 0.0
    %135 = vmatpush.msra.mxu0 0.0
    %136 = vmatpush.msra.mxu0 %v120
    %137 = vmatpush.msra.mxu0 %v119
    %138 = vmatpush.msra.mxu0 %v118
    %139 = vmatpush.msra.mxu0 %v117
    %140 = vmatmul.f32.gmra.mxu0 %v122
    %v141 = vpop.f32.mrf.mxu0
    %v142 = vadd.f32 %v114, %v141
    %143 = vdwg.mxu0
    %vm144 = vcmask 392448
    %v145 = vsel %vm144, %v142, -inf
    %146 = vmax.xlane.f32.xlu0 %v145
    %v147 = vpop.xlane.xlu0 %146
    %v148 = vsub.f32 %v142, %v147
    %v149 = vmul.f32 %v148, 1.442695
    %v150 = vpow.pop %v149
    %152 = vrot.lane.b32.xlu0 %v150, 96
    %v153 = vpop.permute.xlu0 %152
    %vm155 = vcmask 130048
    %v156 = vsel %vm155, %v153, 0.0
    %157 = vadd.xlane.f32.xlu0 %v156
    %v158 = vpop.xlane.xlu0 %157
    %v159 = vlog2.pop %v158
    %v160 = vmul.f32 %v159, 0.6931472
    %v161 = vsub.f32 %v148, %v160
    %163 = vrot.lane.b32.xlu0 %v161, 96
    %v164 = vpop.permute.xlu0 %163
    %166 = vst.msk [vmem:[#allocation10] sm:$0xff] %vm155, %v164
    %167 = vst.msk [vmem:[#allocation11] sm:$0xff] %vm92, %v142
    // Predicated region
    $region38: #{tpu_custom_call.1} parent=1 // pred_check
      _
    $region39: #{tpu_custom_call.1} parent=1 // pred_check_branch
      %169 = sbr.rel (0) target = $region41
    $region40: #{tpu_custom_call.1} parent=1 // pred_region
      %171 = vsyncadd [#allocation4], 0
      %s173 = sshll.u32 [#allocation10], 4
      %s174 = int_to_ptr.vmem [resolvable:$true] %s173
      %s175 = sshll.u32 %s5, 4
      %s176 = int_to_ptr.hbm [resolvable:$true] %s175
      %178 = dma.vmem_to_hbm [thread:$0]  %s174, 128, %s176, [#allocation4]
    $region41: #{tpu_custom_call.1} parent=1 // pred_fallthru
      _
    // Predicated region
    $region42: #{tpu_custom_call.1} parent=1 // pred_check
      _
    $region43: #{tpu_custom_call.1} parent=1 // pred_check_branch
      %180 = sbr.rel (0) target = $region45
    $region44: #{tpu_custom_call.1} parent=1 // pred_region
      %182 = vsyncadd [#allocation12], 0
      %s184 = sshll.u32 [#allocation11], 4
      %s185 = int_to_ptr.vmem [resolvable:$true] %s184
      %s186 = sshll.u32 %s6, 4
      %s187 = int_to_ptr.hbm [resolvable:$true] %s186
      %189 = dma.vmem_to_hbm [thread:$0]  %s185, 128, %s187, [#allocation12]
    $region45: #{tpu_custom_call.1} parent=1 // pred_fallthru
      _
    // Predicated region
    $region46: #{tpu_custom_call.1} parent=1 // pred_check
      _
    $region47: #{tpu_custom_call.1} parent=1 // pred_check_branch
      %191 = sbr.rel (0) target = $region49
    $region48: #{tpu_custom_call.1} parent=1 // pred_region
      %193 = dma.done [#allocation4], 128
    $region49: #{tpu_custom_call.1} parent=1 // pred_fallthru
      _
    // Predicated region
    $region50: #{tpu_custom_call.1} parent=1 // pred_check
      _
    $region51: #{tpu_custom_call.1} parent=1 // pred_check_branch
      %195 = sbr.rel (0) target = $region53
    $region52: #{tpu_custom_call.1} parent=1 // pred_region
      %197 = dma.done [#allocation12], 128
    $region53: #{tpu_custom_call.1} parent=1 // pred_fallthru
      _
    %198 = vsyncpa [#allocation3], 1
    %199 = vsyncpa [#allocation6], 1
    %200 = vsyncpa [#allocation9], 1
    %201 = vsyncpa [#allocation4], 1
    %202 = vsyncpa [#allocation12], 1

</llo_original>
